<compile_context>
chip_gen: v6e
topology: v6e:2x2x1
jax: 0.10.0
libtpu: 0.0.40
codegen_flags: <defaults>
</compile_context>

<pallas_src>
import functools

import jax
import jax.numpy as jnp
from jax.experimental import pallas as pl
from jax.experimental.pallas import tpu as pltpu

NUM_FEATURES = 784
NUM_HIDDEN_1 = 128
NUM_HIDDEN_2 = 256
NUM_CLASSES = 10

F_PAD = 896   # 7 * 128  (feature / K axis of the first matmul)
C_PAD = 128   # lane-dense class axis


def _round_up(v, m):
    return ((v + m - 1) // m) * m


def ff_nn_kernel(x_ref, w1_ref, b1_ref, w2_ref, b2_ref, w3_ref, b3_ref,
                 logits_ref, logp_ref):
    # x_ref: (TB, F_PAD) bf16;  weights bf16;  biases f32.
    x = x_ref[...]

    # linear_1 + relu   (bf16 MXU operands, f32 accumulate, f32 elementwise)
    h1 = jnp.dot(x, w1_ref[...], preferred_element_type=jnp.float32)
    h1 = jnp.maximum(h1 + b1_ref[...], 0.0)

    # linear_2 + relu
    h2 = jnp.dot(h1.astype(jnp.bfloat16), w2_ref[...],
                 preferred_element_type=jnp.float32)
    h2 = jnp.maximum(h2 + b2_ref[...], 0.0)

    # linear_out  (padded class lanes get bias -1e30 -> effectively -inf)
    logits = jnp.dot(h2.astype(jnp.bfloat16), w3_ref[...],
                     preferred_element_type=jnp.float32) + b3_ref[...]

    # log_softmax over the class axis (f32).  Padded lanes contribute exp()=0.
    m = jnp.max(logits, axis=1, keepdims=True)
    shifted = logits - m
    lse = jnp.log(jnp.sum(jnp.exp(shifted), axis=1, keepdims=True))
    logp = shifted - lse

    logits_ref[...] = logits
    logp_ref[...] = logp


@functools.partial(jax.jit, static_argnames=("tb",))
def ff_nn_forward(x, params, *, tb=512):
    w1, b1, w2, b2, w3, b3 = params   # f32 storage, weights stored as (in, out)
    B, F = x.shape

    # --- pad feature (K) axis to 896 and class (N) axis to 128 -------------
    x_p = jnp.pad(x, ((0, 0), (0, F_PAD - F)))
    w1_p = jnp.pad(w1, ((0, F_PAD - F), (0, 0)))
    w3_p = jnp.pad(w3, ((0, 0), (0, C_PAD - NUM_CLASSES)))
    b3_p = jnp.concatenate(
        [b3, jnp.full((1, C_PAD - NUM_CLASSES), -1e30, jnp.float32)], axis=1)

    # --- batch tiling -------------------------------------------------------
    TB = min(tb, _round_up(B, 8))
    B_pad = _round_up(B, TB)
    x_p = jnp.pad(x_p, ((0, B_pad - B), (0, 0)))

    # --- bf16 MXU operands (biases stay f32) --------------------------------
    x_bf = x_p.astype(jnp.bfloat16)
    w1_bf = w1_p.astype(jnp.bfloat16)
    w2_bf = w2.astype(jnp.bfloat16)
    w3_bf = w3_p.astype(jnp.bfloat16)

    grid = (B_pad // TB,)

    def streamed(shape):
        return pl.BlockSpec(shape, lambda i: (i, 0))

    def resident(shape):
        return pl.BlockSpec(shape, lambda i: (0, 0))

    flops = 2 * B_pad * (F_PAD * NUM_HIDDEN_1
                         + NUM_HIDDEN_1 * NUM_HIDDEN_2
                         + NUM_HIDDEN_2 * C_PAD)
    transcendentals = B_pad * (C_PAD + 1)            # exp per logit + log per row
    bytes_accessed = (x_bf.size * 2
                      + (w1_bf.size + w2_bf.size + w3_bf.size) * 2
                      + (b1.size + b2.size + b3_p.size) * 4
                      + 2 * B_pad * C_PAD * 4)

    out_shapes = (
        jax.ShapeDtypeStruct((B_pad, C_PAD), jnp.float32),   # logits (padded)
        jax.ShapeDtypeStruct((B_pad, C_PAD), jnp.float32),   # log-probs (padded)
    )

    logits_p, logp_p = pl.pallas_call(
        ff_nn_kernel,
        out_shape=out_shapes,
        grid=grid,
        in_specs=[
            streamed((TB, F_PAD)),
            resident(w1_bf.shape), resident(b1.shape),
            resident(w2_bf.shape), resident(b2.shape),
            resident(w3_bf.shape), resident(b3_p.shape),
        ],
        out_specs=(
            streamed((TB, C_PAD)),
            streamed((TB, C_PAD)),
        ),
        compiler_params=pltpu.CompilerParams(
            dimension_semantics=("parallel",),
            vmem_limit_bytes=32 << 20,
        ),
        cost_estimate=pl.CostEstimate(
            flops=flops,
            transcendentals=transcendentals,
            bytes_accessed=bytes_accessed),
    )(x_bf, w1_bf, b1, w2_bf, b2, w3_bf, b3_p)

    # Strip batch + class padding.
    return logits_p[:B, :NUM_CLASSES], logp_p[:B, :NUM_CLASSES]


def init_params(key):
    """Deterministic init mirroring the PyTorch module:
    weights ~ N(0, 0.1), biases zeroed.  Stored as (in, out), f32."""
    k1, k2, k3 = jax.random.split(key, 3)
    w1 = 0.1 * jax.random.normal(k1, (NUM_FEATURES, NUM_HIDDEN_1), jnp.float32)
    b1 = jnp.zeros((1, NUM_HIDDEN_1), jnp.float32)
    w2 = 0.1 * jax.random.normal(k2, (NUM_HIDDEN_1, NUM_HIDDEN_2), jnp.float32)
    b2 = jnp.zeros((1, NUM_HIDDEN_2), jnp.float32)
    w3 = 0.1 * jax.random.normal(k3, (NUM_HIDDEN_2, NUM_CLASSES), jnp.float32)
    b3 = jnp.zeros((1, NUM_CLASSES), jnp.float32)
    return (w1, b1, w2, b2, w3, b3)


def reference_forward(x, params):
    """Same math as the kernel (bf16 MXU operands, f32 accumulate/elementwise)."""
    w1, b1, w2, b2, w3, b3 = params
    bf = jnp.bfloat16
    h1 = jnp.maximum(
        jnp.dot(x.astype(bf), w1.astype(bf),
                preferred_element_type=jnp.float32) + b1, 0.0)
    h2 = jnp.maximum(
        jnp.dot(h1.astype(bf), w2.astype(bf),
                preferred_element_type=jnp.float32) + b2, 0.0)
    logits = jnp.dot(h2.astype(bf), w3.astype(bf),
                     preferred_element_type=jnp.float32) + b3
    logp = jax.nn.log_softmax(logits, axis=1)
    return logits, logp


if __name__ == "__main__":
    key = jax.random.PRNGKey(0)
    kx, kp = jax.random.split(key)

    B = 8  # small batch for the smoke test
    x = jax.random.normal(kx, (B, NUM_FEATURES), jnp.float32)
    params = init_params(kp)

    logits, logp = ff_nn_forward(x, params)
    jax.block_until_ready((logits, logp))

    ref_logits, ref_logp = reference_forward(x, params)
    assert logits.shape == (B, NUM_CLASSES) and logp.shape == (B, NUM_CLASSES)
    assert jnp.allclose(logits, ref_logits, atol=2e-2, rtol=2e-2)
    assert jnp.allclose(logp, ref_logp, atol=2e-2, rtol=2e-2)
    assert bool(jnp.all(jnp.isfinite(logp)))

    print("KERNEL_OK")
</pallas_src>

<mosaic_0001>
module attributes {stable_mosaic.version = 11 : i64} {
  func.func @ff_nn_kernel(%arg0: i32, %arg1: memref<8x896xbf16, #tpu.memory_space<vmem>>, %arg2: memref<896x128xbf16, #tpu.memory_space<vmem>>, %arg3: memref<1x128xf32, #tpu.memory_space<vmem>>, %arg4: memref<128x256xbf16, #tpu.memory_space<vmem>>, %arg5: memref<1x256xf32, #tpu.memory_space<vmem>>, %arg6: memref<256x128xbf16, #tpu.memory_space<vmem>>, %arg7: memref<1x128xf32, #tpu.memory_space<vmem>>, %arg8: memref<8x128xf32, #tpu.memory_space<vmem>>, %arg9: memref<8x128xf32, #tpu.memory_space<vmem>>) attributes {dimension_semantics = [#tpu.dimension_semantics<parallel>], iteration_bounds = array<i64: 1>, scalar_prefetch = 0 : i64, scratch_operands = 0 : i64, tpu.core_type = #tpu.core_type<tc>, window_params = [{transform_indices = @transform_0, window_bounds = array<i64: 8, 896>}, {pipeline_mode = #tpu.pipeline_mode<synchronous>, transform_indices = @transform_1, window_bounds = array<i64: 896, 128>}, {pipeline_mode = #tpu.pipeline_mode<synchronous>, transform_indices = @transform_2, window_bounds = array<i64: 1, 128>}, {pipeline_mode = #tpu.pipeline_mode<synchronous>, transform_indices = @transform_3, window_bounds = array<i64: 128, 256>}, {pipeline_mode = #tpu.pipeline_mode<synchronous>, transform_indices = @transform_4, window_bounds = array<i64: 1, 256>}, {pipeline_mode = #tpu.pipeline_mode<synchronous>, transform_indices = @transform_5, window_bounds = array<i64: 256, 128>}, {pipeline_mode = #tpu.pipeline_mode<synchronous>, transform_indices = @transform_6, window_bounds = array<i64: 1, 128>}, {transform_indices = @transform_7, window_bounds = array<i64: 8, 128>}, {transform_indices = @transform_8, window_bounds = array<i64: 8, 128>}]} {
    %c0 = arith.constant 0 : index
    %c0_0 = arith.constant 0 : index
    %0 = vector.load %arg1[%c0, %c0_0] : memref<8x896xbf16, #tpu.memory_space<vmem>>, vector<8x896xbf16>
    %c0_1 = arith.constant 0 : index
    %c0_2 = arith.constant 0 : index
    %1 = vector.load %arg2[%c0_1, %c0_2] : memref<896x128xbf16, #tpu.memory_space<vmem>>, vector<896x128xbf16>
    %cst = arith.constant dense<0.000000e+00> : vector<8x128xf32>
    %2 = tpu.matmul %0, %1, %cst {dimension_numbers = #tpu.dot_dimension_numbers<[1], [0], [0], [1], [0, 0, 1, 1], [], []>} : vector<8x896xbf16>, vector<896x128xbf16>, vector<8x128xf32> -> vector<8x128xf32>
    %c0_3 = arith.constant 0 : index
    %c0_4 = arith.constant 0 : index
    %3 = vector.load %arg3[%c0_3, %c0_4] : memref<1x128xf32, #tpu.memory_space<vmem>>, vector<1x128xf32>
    %4 = vector.broadcast %3 : vector<1x128xf32> to vector<8x128xf32>
    %5 = arith.addf %2, %4 : vector<8x128xf32>
    %cst_5 = arith.constant 0.000000e+00 : f32
    %6 = vector.broadcast %cst_5 : f32 to vector<8x128xf32>
    %7 = arith.maximumf %5, %6 : vector<8x128xf32>
    %8 = arith.truncf %7 : vector<8x128xf32> to vector<8x128xbf16>
    %c0_6 = arith.constant 0 : index
    %c0_7 = arith.constant 0 : index
    %9 = vector.load %arg4[%c0_6, %c0_7] : memref<128x256xbf16, #tpu.memory_space<vmem>>, vector<128x256xbf16>
    %cst_8 = arith.constant dense<0.000000e+00> : vector<8x256xf32>
    %10 = tpu.matmul %8, %9, %cst_8 {dimension_numbers = #tpu.dot_dimension_numbers<[1], [0], [0], [1], [0, 0, 1, 1], [], []>} : vector<8x128xbf16>, vector<128x256xbf16>, vector<8x256xf32> -> vector<8x256xf32>
    %c0_9 = arith.constant 0 : index
    %c0_10 = arith.constant 0 : index
    %11 = vector.load %arg5[%c0_9, %c0_10] : memref<1x256xf32, #tpu.memory_space<vmem>>, vector<1x256xf32>
    %12 = vector.broadcast %11 : vector<1x256xf32> to vector<8x256xf32>
    %13 = arith.addf %10, %12 : vector<8x256xf32>
    %cst_11 = arith.constant 0.000000e+00 : f32
    %14 = vector.broadcast %cst_11 : f32 to vector<8x256xf32>
    %15 = arith.maximumf %13, %14 : vector<8x256xf32>
    %16 = arith.truncf %15 : vector<8x256xf32> to vector<8x256xbf16>
    %c0_12 = arith.constant 0 : index
    %c0_13 = arith.constant 0 : index
    %17 = vector.load %arg6[%c0_12, %c0_13] : memref<256x128xbf16, #tpu.memory_space<vmem>>, vector<256x128xbf16>
    %cst_14 = arith.constant dense<0.000000e+00> : vector<8x128xf32>
    %18 = tpu.matmul %16, %17, %cst_14 {dimension_numbers = #tpu.dot_dimension_numbers<[1], [0], [0], [1], [0, 0, 1, 1], [], []>} : vector<8x256xbf16>, vector<256x128xbf16>, vector<8x128xf32> -> vector<8x128xf32>
    %c0_15 = arith.constant 0 : index
    %c0_16 = arith.constant 0 : index
    %19 = vector.load %arg7[%c0_15, %c0_16] : memref<1x128xf32, #tpu.memory_space<vmem>>, vector<1x128xf32>
    %20 = vector.broadcast %19 : vector<1x128xf32> to vector<8x128xf32>
    %21 = arith.addf %18, %20 : vector<8x128xf32>
    %cst_17 = arith.constant dense<0xFF800000> : vector<8xf32>
    %22 = vector.multi_reduction <maximumf>, %21, %cst_17 [1] : vector<8x128xf32> to vector<8xf32>
    %23 = vector.shape_cast %22 : vector<8xf32> to vector<8x1xf32>
    %24 = vector.broadcast %23 : vector<8x1xf32> to vector<8x128xf32>
    %25 = arith.subf %21, %24 : vector<8x128xf32>
    %26 = math.exp %25 : vector<8x128xf32>
    %cst_18 = arith.constant dense<0.000000e+00> : vector<8xf32>
    %27 = vector.multi_reduction <add>, %26, %cst_18 [1] : vector<8x128xf32> to vector<8xf32>
    %28 = vector.shape_cast %27 : vector<8xf32> to vector<8x1xf32>
    %29 = math.log %28 : vector<8x1xf32>
    %30 = vector.broadcast %29 : vector<8x1xf32> to vector<8x128xf32>
    %31 = arith.subf %25, %30 : vector<8x128xf32>
    %c0_19 = arith.constant 0 : index
    %c0_20 = arith.constant 0 : index
    %32 = vector.load %arg8[%c0_19, %c0_20] : memref<8x128xf32, #tpu.memory_space<vmem>>, vector<8x128xf32>
    tpu.vector_store %arg8[%c0_19, %c0_20], %21 {strides = array<i32>} : memref<8x128xf32, #tpu.memory_space<vmem>>, vector<8x128xf32>,
    %c0_21 = arith.constant 0 : index
    %c0_22 = arith.constant 0 : index
    %33 = vector.load %arg9[%c0_21, %c0_22] : memref<8x128xf32, #tpu.memory_space<vmem>>, vector<8x128xf32>
    tpu.vector_store %arg9[%c0_21, %c0_22], %31 {strides = array<i32>} : memref<8x128xf32, #tpu.memory_space<vmem>>, vector<8x128xf32>,
    return
  }
  func.func @transform_0(%arg0: i32) -> (i32, i32) {
    %c0_i32 = arith.constant 0 : i32
    %c0_i32_0 = arith.constant 0 : i32
    return %arg0, %c0_i32 : i32, i32
  }
  func.func @transform_1(%arg0: i32) -> (i32, i32) {
    %c0_i32 = arith.constant 0 : i32
    %c0_i32_0 = arith.constant 0 : i32
    %c0_i32_1 = arith.constant 0 : i32
    return %c0_i32, %c0_i32_0 : i32, i32
  }
  func.func @transform_2(%arg0: i32) -> (i32, i32) {
    %c0_i32 = arith.constant 0 : i32
    %c0_i32_0 = arith.constant 0 : i32
    %c0_i32_1 = arith.constant 0 : i32
    return %c0_i32, %c0_i32_0 : i32, i32
  }
  func.func @transform_3(%arg0: i32) -> (i32, i32) {
    %c0_i32 = arith.constant 0 : i32
    %c0_i32_0 = arith.constant 0 : i32
    %c0_i32_1 = arith.constant 0 : i32
    return %c0_i32, %c0_i32_0 : i32, i32
  }
  func.func @transform_4(%arg0: i32) -> (i32, i32) {
    %c0_i32 = arith.constant 0 : i32
    %c0_i32_0 = arith.constant 0 : i32
    %c0_i32_1 = arith.constant 0 : i32
    return %c0_i32, %c0_i32_0 : i32, i32
  }
  func.func @transform_5(%arg0: i32) -> (i32, i32) {
    %c0_i32 = arith.constant 0 : i32
    %c0_i32_0 = arith.constant 0 : i32
    %c0_i32_1 = arith.constant 0 : i32
    return %c0_i32, %c0_i32_0 : i32, i32
  }
  func.func @transform_6(%arg0: i32) -> (i32, i32) {
    %c0_i32 = arith.constant 0 : i32
    %c0_i32_0 = arith.constant 0 : i32
    %c0_i32_1 = arith.constant 0 : i32
    return %c0_i32, %c0_i32_0 : i32, i32
  }
  func.func @transform_7(%arg0: i32) -> (i32, i32) {
    %c0_i32 = arith.constant 0 : i32
    %c0_i32_0 = arith.constant 0 : i32
    return %arg0, %c0_i32 : i32, i32
  }
  func.func @transform_8(%arg0: i32) -> (i32, i32) {
    %c0_i32 = arith.constant 0 : i32
    %c0_i32_0 = arith.constant 0 : i32
    return %arg0, %c0_i32 : i32, i32
  }
}

</mosaic_0001>

<llo_original>
// kernel: ff_nn_forward.1
$region0: #{ff_nn_forward.1}
  #allocation0 [shape = 'u32[]', space=smem, size = 0x4, offset = 0x4, fixed_abs, tag = 'smem constant byte address 0x4 - core index']
  #allocation1 [shape = 'u32[144,128]{1,0:T(1,128)}', space=vmem, size = 0x12000, scoped, tag = 'internal scratch']
  %s0 = inlined_call_operand.vmem [shape: bf16[8,896], index: 0, kind: input, shape index: {}]
  %s1 = inlined_call_operand.vmem [shape: bf16[896,128], index: 1, kind: input, shape index: {}]
  %s2 = inlined_call_operand.vmem [shape: f32[1,128], index: 2, kind: input, shape index: {}]
  %s3 = inlined_call_operand.vmem [shape: bf16[128,256], index: 3, kind: input, shape index: {}]
  %s4 = inlined_call_operand.vmem [shape: f32[1,256], index: 4, kind: input, shape index: {}]
  %s5 = inlined_call_operand.vmem [shape: bf16[256,128], index: 5, kind: input, shape index: {}]
  %s6 = inlined_call_operand.vmem [shape: f32[1,128], index: 6, kind: input, shape index: {}]
  %s7 = inlined_call_operand.hbm [shape: f32[8,128], index: 7, kind: output, shape index: {0}]
  %s8 = inlined_call_operand.hbm [shape: f32[8,128], index: 8, kind: output, shape index: {1}]
  %9 = xla_tuple %s7, %s8
  %s10 = sld [smem:[#allocation0]]
  $region46: #{ff_nn_forward.1} parent=0
    _
  %s12 = ssub.s32 1, %s10
  %s13 = scalar_select 0, %s12, %s10
  $region1: #{ff_nn_forward.1} parent=0
    #allocation2 [shape = 'u8[4096]{0}', space=vmem, size = 0x1000, scoped, tag = 'output window, operand 0, single buffered']
    #allocation3 [shape = 's32[1]{0}', space=sflag, size = 0x4, scoped, tag = 'scoped memory for ff_nn_forward.1']
    #allocation4 [shape = 'u8[4096]{0}', space=vmem, size = 0x1000, scoped, tag = 'output window, operand 1, single buffered']
    #allocation5 [shape = 's32[1]{0}', space=sflag, size = 0x4, scoped, tag = 'scoped memory for ff_nn_forward.1']
    %14 = vsyncpa [#allocation3], 0
    %15 = vsyncpa [#allocation5], 0
    // Predicated region
    $region2: #{ff_nn_forward.1} parent=1 // pred_check
      _
    $region3: #{ff_nn_forward.1} parent=1 // pred_check_branch
      %17 = sbr.rel (0) target = $region5
    $region4: #{ff_nn_forward.1} parent=1 // pred_region
      _
    $region5: #{ff_nn_forward.1} parent=1 // pred_fallthru
      _
    // Predicated region
    $region6: #{ff_nn_forward.1} parent=1 // pred_check
      _
    $region7: #{ff_nn_forward.1} parent=1 // pred_check_branch
      %19 = sbr.rel (0) target = $region9
    $region8: #{ff_nn_forward.1} parent=1 // pred_region
      _
    $region9: #{ff_nn_forward.1} parent=1 // pred_fallthru
      _
    // Predicated region
    $region10: #{ff_nn_forward.1} parent=1 // pred_check
      _
    $region11: #{ff_nn_forward.1} parent=1 // pred_check_branch
      %21 = sbr.rel (0) target = $region13
    $region12: #{ff_nn_forward.1} parent=1 // pred_region
      _
    $region13: #{ff_nn_forward.1} parent=1 // pred_fallthru
      _
    // Predicated region
    $region14: #{ff_nn_forward.1} parent=1 // pred_check
      _
    $region15: #{ff_nn_forward.1} parent=1 // pred_check_branch
      %23 = sbr.rel (0) target = $region17
    $region16: #{ff_nn_forward.1} parent=1 // pred_region
      _
    $region17: #{ff_nn_forward.1} parent=1 // pred_fallthru
      _
    // Predicated region
    $region18: #{ff_nn_forward.1} parent=1 // pred_check
      _
    $region19: #{ff_nn_forward.1} parent=1 // pred_check_branch
      %25 = sbr.rel (0) target = $region21
    $region20: #{ff_nn_forward.1} parent=1 // pred_region
      _
    $region21: #{ff_nn_forward.1} parent=1 // pred_fallthru
      _
    // Predicated region
    $region22: #{ff_nn_forward.1} parent=1 // pred_check
      _
    $region23: #{ff_nn_forward.1} parent=1 // pred_check_branch
      %27 = sbr.rel (0) target = $region25
    $region24: #{ff_nn_forward.1} parent=1 // pred_region
      _
    $region25: #{ff_nn_forward.1} parent=1 // pred_fallthru
      _
    // Predicated region
    $region26: #{ff_nn_forward.1} parent=1 // pred_check
      _
    $region27: #{ff_nn_forward.1} parent=1 // pred_check_branch
      %29 = sbr.rel (0) target = $region29
    $region28: #{ff_nn_forward.1} parent=1 // pred_region
      _
    $region29: #{ff_nn_forward.1} parent=1 // pred_fallthru
      _
    %v31 = vld [vmem:[%s0] sm:$0xff]
    %v32 = vld [vmem:[%s0 + $0x8] sm:$0xff]
    %v33 = vld [vmem:[%s0 + $0x10] sm:$0xff]
    %v34 = vld [vmem:[%s0 + $0x18] sm:$0xf]
    %v35 = vld [vmem:[%s1] sm:$0xf]
    %v36 = vld [vmem:[%s1 + $0x4] sm:$0xf]
    %v37 = vld [vmem:[%s1 + $0x8] sm:$0xf]
    %v38 = vld [vmem:[%s1 + $0xc] sm:$0xf]
    %v39 = vld [vmem:[%s1 + $0x10] sm:$0xf]
    %v40 = vld [vmem:[%s1 + $0x14] sm:$0xf]
    %v41 = vld [vmem:[%s1 + $0x18] sm:$0xf]
    %v42 = vld [vmem:[%s1 + $0x1c] sm:$0xf]
    %v43 = vld [vmem:[%s1 + $0x20] sm:$0xf]
    %v44 = vld [vmem:[%s1 + $0x24] sm:$0xf]
    %v45 = vld [vmem:[%s1 + $0x28] sm:$0xf]
    %v46 = vld [vmem:[%s1 + $0x2c] sm:$0xf]
    %v47 = vld [vmem:[%s1 + $0x30] sm:$0xf]
    %v48 = vld [vmem:[%s1 + $0x34] sm:$0xf]
    %v49 = vld [vmem:[%s1 + $0x38] sm:$0xf]
    %v50 = vld [vmem:[%s1 + $0x3c] sm:$0xf]
    %v51 = vld [vmem:[%s1 + $0x40] sm:$0xf]
    %v52 = vld [vmem:[%s1 + $0x44] sm:$0xf]
    %v53 = vld [vmem:[%s1 + $0x48] sm:$0xf]
    %v54 = vld [vmem:[%s1 + $0x4c] sm:$0xf]
    %v55 = vld [vmem:[%s1 + $0x50] sm:$0xf]
    %v56 = vld [vmem:[%s1 + $0x54] sm:$0xf]
    %v57 = vld [vmem:[%s1 + $0x58] sm:$0xf]
    %v58 = vld [vmem:[%s1 + $0x5c] sm:$0xf]
    %v59 = vld [vmem:[%s1 + $0x60] sm:$0xf]
    %v60 = vld [vmem:[%s1 + $0x64] sm:$0xf]
    %v61 = vld [vmem:[%s1 + $0x68] sm:$0xf]
    %v62 = vld [vmem:[%s1 + $0x6c] sm:$0xf]
    %v63 = vld [vmem:[%s1 + $0x70] sm:$0xf]
    %v64 = vld [vmem:[%s1 + $0x74] sm:$0xf]
    %v65 = vld [vmem:[%s1 + $0x78] sm:$0xf]
    %v66 = vld [vmem:[%s1 + $0x7c] sm:$0xf]
    %v67 = vld [vmem:[%s1 + $0x80] sm:$0xf]
    %v68 = vld [vmem:[%s1 + $0x84] sm:$0xf]
    %v69 = vld [vmem:[%s1 + $0x88] sm:$0xf]
    %v70 = vld [vmem:[%s1 + $0x8c] sm:$0xf]
    %v71 = vld [vmem:[%s1 + $0x90] sm:$0xf]
    %v72 = vld [vmem:[%s1 + $0x94] sm:$0xf]
    %v73 = vld [vmem:[%s1 + $0x98] sm:$0xf]
    %v74 = vld [vmem:[%s1 + $0x9c] sm:$0xf]
    %v75 = vld [vmem:[%s1 + $0xa0] sm:$0xf]
    %v76 = vld [vmem:[%s1 + $0xa4] sm:$0xf]
    %v77 = vld [vmem:[%s1 + $0xa8] sm:$0xf]
    %v78 = vld [vmem:[%s1 + $0xac] sm:$0xf]
    %v79 = vld [vmem:[%s1 + $0xb0] sm:$0xf]
    %v80 = vld [vmem:[%s1 + $0xb4] sm:$0xf]
    %v81 = vld [vmem:[%s1 + $0xb8] sm:$0xf]
    %v82 = vld [vmem:[%s1 + $0xbc] sm:$0xf]
    %v83 = vld [vmem:[%s1 + $0xc0] sm:$0xf]
    %v84 = vld [vmem:[%s1 + $0xc4] sm:$0xf]
    %v85 = vld [vmem:[%s1 + $0xc8] sm:$0xf]
    %v86 = vld [vmem:[%s1 + $0xcc] sm:$0xf]
    %v87 = vld [vmem:[%s1 + $0xd0] sm:$0xf]
    %v88 = vld [vmem:[%s1 + $0xd4] sm:$0xf]
    %v89 = vld [vmem:[%s1 + $0xd8] sm:$0xf]
    %v90 = vld [vmem:[%s1 + $0xdc] sm:$0xf]
    %v91 = vld [vmem:[%s1 + $0xe0] sm:$0xf]
    %v92 = vld [vmem:[%s1 + $0xe4] sm:$0xf]
    %v93 = vld [vmem:[%s1 + $0xe8] sm:$0xf]
    %v94 = vld [vmem:[%s1 + $0xec] sm:$0xf]
    %v95 = vld [vmem:[%s1 + $0xf0] sm:$0xf]
    %v96 = vld [vmem:[%s1 + $0xf4] sm:$0xf]
    %v97 = vld [vmem:[%s1 + $0xf8] sm:$0xf]
    %v98 = vld [vmem:[%s1 + $0xfc] sm:$0xf]
    %v99 = vld [vmem:[%s1 + $0x100] sm:$0xf]
    %v100 = vld [vmem:[%s1 + $0x104] sm:$0xf]
    %v101 = vld [vmem:[%s1 + $0x108] sm:$0xf]
    %v102 = vld [vmem:[%s1 + $0x10c] sm:$0xf]
    %v103 = vld [vmem:[%s1 + $0x110] sm:$0xf]
    %v104 = vld [vmem:[%s1 + $0x114] sm:$0xf]
    %v105 = vld [vmem:[%s1 + $0x118] sm:$0xf]
    %v106 = vld [vmem:[%s1 + $0x11c] sm:$0xf]
    %v107 = vld [vmem:[%s1 + $0x120] sm:$0xf]
    %v108 = vld [vmem:[%s1 + $0x124] sm:$0xf]
    %v109 = vld [vmem:[%s1 + $0x128] sm:$0xf]
    %v110 = vld [vmem:[%s1 + $0x12c] sm:$0xf]
    %v111 = vld [vmem:[%s1 + $0x130] sm:$0xf]
    %v112 = vld [vmem:[%s1 + $0x134] sm:$0xf]
    %v113 = vld [vmem:[%s1 + $0x138] sm:$0xf]
    %v114 = vld [vmem:[%s1 + $0x13c] sm:$0xf]
    %v115 = vld [vmem:[%s1 + $0x140] sm:$0xf]
    %v116 = vld [vmem:[%s1 + $0x144] sm:$0xf]
    %v117 = vld [vmem:[%s1 + $0x148] sm:$0xf]
    %v118 = vld [vmem:[%s1 + $0x14c] sm:$0xf]
    %v119 = vld [vmem:[%s1 + $0x150] sm:$0xf]
    %v120 = vld [vmem:[%s1 + $0x154] sm:$0xf]
    %v121 = vld [vmem:[%s1 + $0x158] sm:$0xf]
    %v122 = vld [vmem:[%s1 + $0x15c] sm:$0xf]
    %v123 = vld [vmem:[%s1 + $0x160] sm:$0xf]
    %v124 = vld [vmem:[%s1 + $0x164] sm:$0xf]
    %v125 = vld [vmem:[%s1 + $0x168] sm:$0xf]
    %v126 = vld [vmem:[%s1 + $0x16c] sm:$0xf]
    %v127 = vld [vmem:[%s1 + $0x170] sm:$0xf]
    %v128 = vld [vmem:[%s1 + $0x174] sm:$0xf]
    %v129 = vld [vmem:[%s1 + $0x178] sm:$0xf]
    %v130 = vld [vmem:[%s1 + $0x17c] sm:$0xf]
    %v131 = vld [vmem:[%s1 + $0x180] sm:$0xf]
    %v132 = vld [vmem:[%s1 + $0x184] sm:$0xf]
    %v133 = vld [vmem:[%s1 + $0x188] sm:$0xf]
    %v134 = vld [vmem:[%s1 + $0x18c] sm:$0xf]
    %v135 = vld [vmem:[%s1 + $0x190] sm:$0xf]
    %v136 = vld [vmem:[%s1 + $0x194] sm:$0xf]
    %v137 = vld [vmem:[%s1 + $0x198] sm:$0xf]
    %v138 = vld [vmem:[%s1 + $0x19c] sm:$0xf]
    %v139 = vld [vmem:[%s1 + $0x1a0] sm:$0xf]
    %v140 = vld [vmem:[%s1 + $0x1a4] sm:$0xf]
    %v141 = vld [vmem:[%s1 + $0x1a8] sm:$0xf]
    %v142 = vld [vmem:[%s1 + $0x1ac] sm:$0xf]
    %v143 = vld [vmem:[%s1 + $0x1b0] sm:$0xf]
    %v144 = vld [vmem:[%s1 + $0x1b4] sm:$0xf]
    %v145 = vld [vmem:[%s1 + $0x1b8] sm:$0xf]
    %v146 = vld [vmem:[%s1 + $0x1bc] sm:$0xf]
    %v147 = vld [vmem:[%s2] sm:$0x1]
    %v149 = vlaneseq
    %v150 = vshrl.u32 %v149, 7
    %v151 = vsub.s32 0, %v150
    %v152 = vrot.slane %v147, %v151
    %v158 = vunpack.c.l.b16 %v31
    %v159 = vunpack.c.h.b16 %v31
    %v160 = vunpack.c.l.b16 %v32
    %v161 = vunpack.c.h.b16 %v32
    %v162 = vunpack.c.l.b16 %v33
    %v163 = vunpack.c.h.b16 %v33
    %v164 = vunpack.c.l.b16 %v34
    %v165 = vpack.c.b16 %v158, %v158
    %v166 = vpack.c.b16 %v159, %v159
    %v167 = vpack.c.b16 %v160, %v160
    %v168 = vpack.c.b16 %v161, %v161
    %v169 = vpack.c.b16 %v162, %v162
    %v170 = vpack.c.b16 %v163, %v163
    %v171 = vpack.c.b16 %v164, %v164
    %v291 = vunpack.c.l.b16 %v35
    %v292 = vunpack.c.l.b16 %v36
    %v293 = vunpack.c.l.b16 %v37
    %v294 = vunpack.c.l.b16 %v38
    %v295 = vunpack.c.l.b16 %v39
    %v296 = vunpack.c.l.b16 %v40
    %v297 = vunpack.c.l.b16 %v41
    %v298 = vunpack.c.l.b16 %v42
    %v299 = vunpack.c.l.b16 %v43
    %v300 = vunpack.c.l.b16 %v44
    %v301 = vunpack.c.l.b16 %v45
    %v302 = vunpack.c.l.b16 %v46
    %v303 = vunpack.c.l.b16 %v47
    %v304 = vunpack.c.l.b16 %v48
    %v305 = vunpack.c.l.b16 %v49
    %v306 = vunpack.c.l.b16 %v50
    %v307 = vunpack.c.l.b16 %v51
    %v308 = vunpack.c.l.b16 %v52
    %v309 = vunpack.c.l.b16 %v53
    %v310 = vunpack.c.l.b16 %v54
    %v311 = vunpack.c.l.b16 %v55
    %v312 = vunpack.c.l.b16 %v56
    %v313 = vunpack.c.l.b16 %v57
    %v314 = vunpack.c.l.b16 %v58
    %v315 = vunpack.c.l.b16 %v59
    %v316 = vunpack.c.l.b16 %v60
    %v317 = vunpack.c.l.b16 %v61
    %v318 = vunpack.c.l.b16 %v62
    %v319 = vunpack.c.l.b16 %v63
    %v320 = vunpack.c.l.b16 %v64
    %v321 = vunpack.c.l.b16 %v65
    %v322 = vunpack.c.l.b16 %v66
    %v323 = vunpack.c.l.b16 %v67
    %v324 = vunpack.c.l.b16 %v68
    %v325 = vunpack.c.l.b16 %v69
    %v326 = vunpack.c.l.b16 %v70
    %v327 = vunpack.c.l.b16 %v71
    %v328 = vunpack.c.l.b16 %v72
    %v329 = vunpack.c.l.b16 %v73
    %v330 = vunpack.c.l.b16 %v74
    %v331 = vunpack.c.l.b16 %v75
    %v332 = vunpack.c.l.b16 %v76
    %v333 = vunpack.c.l.b16 %v77
    %v334 = vunpack.c.l.b16 %v78
    %v335 = vunpack.c.l.b16 %v79
    %v336 = vunpack.c.l.b16 %v80
    %v337 = vunpack.c.l.b16 %v81
    %v338 = vunpack.c.l.b16 %v82
    %v339 = vunpack.c.l.b16 %v83
    %v340 = vunpack.c.l.b16 %v84
    %v341 = vunpack.c.l.b16 %v85
    %v342 = vunpack.c.l.b16 %v86
    %v343 = vunpack.c.l.b16 %v87
    %v344 = vunpack.c.l.b16 %v88
    %v345 = vunpack.c.l.b16 %v89
    %v346 = vunpack.c.l.b16 %v90
    %v347 = vunpack.c.l.b16 %v91
    %v348 = vunpack.c.l.b16 %v92
    %v349 = vunpack.c.l.b16 %v93
    %v350 = vunpack.c.l.b16 %v94
    %v351 = vunpack.c.l.b16 %v95
    %v352 = vunpack.c.l.b16 %v96
    %v353 = vunpack.c.l.b16 %v97
    %v354 = vunpack.c.l.b16 %v98
    %v355 = vunpack.c.l.b16 %v99
    %v356 = vunpack.c.l.b16 %v100
    %v357 = vunpack.c.l.b16 %v101
    %v358 = vunpack.c.l.b16 %v102
    %v359 = vunpack.c.l.b16 %v103
    %v360 = vunpack.c.l.b16 %v104
    %v361 = vunpack.c.l.b16 %v105
    %v362 = vunpack.c.l.b16 %v106
    %v363 = vunpack.c.l.b16 %v107
    %v364 = vunpack.c.l.b16 %v108
    %v365 = vunpack.c.l.b16 %v109
    %v366 = vunpack.c.l.b16 %v110
    %v367 = vunpack.c.l.b16 %v111
    %v368 = vunpack.c.l.b16 %v112
    %v369 = vunpack.c.l.b16 %v113
    %v370 = vunpack.c.l.b16 %v114
    %v371 = vunpack.c.l.b16 %v115
    %v372 = vunpack.c.l.b16 %v116
    %v373 = vunpack.c.l.b16 %v117
    %v374 = vunpack.c.l.b16 %v118
    %v375 = vunpack.c.l.b16 %v119
    %v376 = vunpack.c.l.b16 %v120
    %v377 = vunpack.c.l.b16 %v121
    %v378 = vunpack.c.l.b16 %v122
    %v379 = vunpack.c.l.b16 %v123
    %v380 = vunpack.c.l.b16 %v124
    %v381 = vunpack.c.l.b16 %v125
    %v382 = vunpack.c.l.b16 %v126
    %v383 = vunpack.c.l.b16 %v127
    %v384 = vunpack.c.l.b16 %v128
    %v385 = vunpack.c.l.b16 %v129
    %v386 = vunpack.c.l.b16 %v130
    %v387 = vunpack.c.l.b16 %v131
    %v388 = vunpack.c.l.b16 %v132
    %v389 = vunpack.c.l.b16 %v133
    %v390 = vunpack.c.l.b16 %v134
    %v391 = vunpack.c.l.b16 %v135
    %v392 = vunpack.c.l.b16 %v136
    %v393 = vunpack.c.l.b16 %v137
    %v394 = vunpack.c.l.b16 %v138
    %v395 = vunpack.c.l.b16 %v139
    %v396 = vunpack.c.l.b16 %v140
    %v397 = vunpack.c.l.b16 %v141
    %v398 = vunpack.c.l.b16 %v142
    %v399 = vunpack.c.l.b16 %v143
    %v400 = vunpack.c.l.b16 %v144
    %v401 = vunpack.c.l.b16 %v145
    %v402 = vunpack.c.l.b16 %v146
    %v403 = vpack.c.b16 %v292, %v291
    %v404 = vpack.c.b16 %v294, %v293
    %v405 = vpack.c.b16 %v296, %v295
    %v406 = vpack.c.b16 %v298, %v297
    %v407 = vpack.c.b16 %v300, %v299
    %v408 = vpack.c.b16 %v302, %v301
    %v409 = vpack.c.b16 %v304, %v303
    %v410 = vpack.c.b16 %v306, %v305
    %v411 = vpack.c.b16 %v308, %v307
    %v412 = vpack.c.b16 %v310, %v309
    %v413 = vpack.c.b16 %v312, %v311
    %v414 = vpack.c.b16 %v314, %v313
    %v415 = vpack.c.b16 %v316, %v315
    %v416 = vpack.c.b16 %v318, %v317
    %v417 = vpack.c.b16 %v320, %v319
    %v418 = vpack.c.b16 %v322, %v321
    %v419 = vpack.c.b16 %v324, %v323
    %v420 = vpack.c.b16 %v326, %v325
    %v421 = vpack.c.b16 %v328, %v327
    %v422 = vpack.c.b16 %v330, %v329
    %v423 = vpack.c.b16 %v332, %v331
    %v424 = vpack.c.b16 %v334, %v333
    %v425 = vpack.c.b16 %v336, %v335
    %v426 = vpack.c.b16 %v338, %v337
    %v427 = vpack.c.b16 %v340, %v339
    %v428 = vpack.c.b16 %v342, %v341
    %v429 = vpack.c.b16 %v344, %v343
    %v430 = vpack.c.b16 %v346, %v345
    %v431 = vpack.c.b16 %v348, %v347
    %v432 = vpack.c.b16 %v350, %v349
    %v433 = vpack.c.b16 %v352, %v351
    %v434 = vpack.c.b16 %v354, %v353
    %v435 = vpack.c.b16 %v356, %v355
    %v436 = vpack.c.b16 %v358, %v357
    %v437 = vpack.c.b16 %v360, %v359
    %v438 = vpack.c.b16 %v362, %v361
    %v439 = vpack.c.b16 %v364, %v363
    %v440 = vpack.c.b16 %v366, %v365
    %v441 = vpack.c.b16 %v368, %v367
    %v442 = vpack.c.b16 %v370, %v369
    %v443 = vpack.c.b16 %v372, %v371
    %v444 = vpack.c.b16 %v374, %v373
    %v445 = vpack.c.b16 %v376, %v375
    %v446 = vpack.c.b16 %v378, %v377
    %v447 = vpack.c.b16 %v380, %v379
    %v448 = vpack.c.b16 %v382, %v381
    %v449 = vpack.c.b16 %v384, %v383
    %v450 = vpack.c.b16 %v386, %v385
    %v451 = vpack.c.b16 %v388, %v387
    %v452 = vpack.c.b16 %v390, %v389
    %v453 = vpack.c.b16 %v392, %v391
    %v454 = vpack.c.b16 %v394, %v393
    %v455 = vpack.c.b16 %v396, %v395
    %v456 = vpack.c.b16 %v398, %v397
    %v457 = vpack.c.b16 %v400, %v399
    %v458 = vpack.c.b16 %v402, %v401
    %515 = vmatprep.subr.bf16.mxu0 0
    %516 = vmatpush1.bf16.msra.mxu0 %v410
    %517 = vmatprep.subr.bf16.mxu0 0
    %518 = vmatpush1.bf16.msra.mxu0 %v409
    %519 = vmatprep.subr.bf16.mxu0 0
    %520 = vmatpush1.bf16.msra.mxu0 %v408
    %521 = vmatprep.subr.bf16.mxu0 0
    %522 = vmatpush1.bf16.msra.mxu0 %v407
    %523 = vmatprep.subr.bf16.mxu0 0
    %524 = vmatpush1.bf16.msra.mxu0 %v406
    %525 = vmatprep.subr.bf16.mxu0 0
    %526 = vmatpush1.bf16.msra.mxu0 %v405
    %527 = vmatprep.subr.bf16.mxu0 0
    %528 = vmatpush1.bf16.msra.mxu0 %v404
    %529 = vmatprep.subr.bf16.mxu0 0
    %530 = vmatpush1.bf16.msra.mxu0 %v403
    %531 = vmatprep.subr.bf16.mxu0 0
    %532 = vmatpush2.bf16.msra.mxu0 %v418
    %533 = vmatprep.subr.bf16.mxu0 0
    %534 = vmatpush2.bf16.msra.mxu0 %v417
    %535 = vmatprep.subr.bf16.mxu0 0
    %536 = vmatpush2.bf16.msra.mxu0 %v416
    %537 = vmatprep.subr.bf16.mxu0 0
    %538 = vmatpush2.bf16.msra.mxu0 %v415
    %539 = vmatprep.subr.bf16.mxu0 0
    %540 = vmatpush2.bf16.msra.mxu0 %v414
    %541 = vmatprep.subr.bf16.mxu0 0
    %542 = vmatpush2.bf16.msra.mxu0 %v413
    %543 = vmatprep.subr.bf16.mxu0 0
    %544 = vmatpush2.bf16.msra.mxu0 %v412
    %545 = vmatprep.subr.bf16.mxu0 0
    %546 = vmatpush2.bf16.msra.mxu0 %v411
    %547 = vmatprep.mubr.bf16.mxu0 %v166
    %548 = vmatmul.mubr.bf16.gmra.mxu0 %v165
    %v549 = vpop.f32.mrf.mxu0
    %v550 = vadd.f32 %v152, %v549
    %v551 = vpop.f32.mrf.mxu0
    %v552 = vpop.f32.mrf.mxu0
    %v553 = vpop.f32.mrf.mxu0
    %554 = vdwg.mxu0
    %555 = vmatprep.subr.bf16.mxu0 0
    %556 = vmatpush1.bf16.msra.mxu0 %v426
    %557 = vmatprep.subr.bf16.mxu0 0
    %558 = vmatpush1.bf16.msra.mxu0 %v425
    %559 = vmatprep.subr.bf16.mxu0 0
    %560 = vmatpush1.bf16.msra.mxu0 %v424
    %561 = vmatprep.subr.bf16.mxu0 0
    %562 = vmatpush1.bf16.msra.mxu0 %v423
    %563 = vmatprep.subr.bf16.mxu0 0
    %564 = vmatpush1.bf16.msra.mxu0 %v422
    %565 = vmatprep.subr.bf16.mxu0 0
    %566 = vmatpush1.bf16.msra.mxu0 %v421
    %567 = vmatprep.subr.bf16.mxu0 0
    %568 = vmatpush1.bf16.msra.mxu0 %v420
    %569 = vmatprep.subr.bf16.mxu0 0
    %570 = vmatpush1.bf16.msra.mxu0 %v419
    %571 = vmatprep.subr.bf16.mxu0 0
    %572 = vmatpush2.bf16.msra.mxu0 %v434
    %573 = vmatprep.subr.bf16.mxu0 0
    %574 = vmatpush2.bf16.msra.mxu0 %v433
    %575 = vmatprep.subr.bf16.mxu0 0
    %576 = vmatpush2.bf16.msra.mxu0 %v432
    %577 = vmatprep.subr.bf16.mxu0 0
    %578 = vmatpush2.bf16.msra.mxu0 %v431
    %579 = vmatprep.subr.bf16.mxu0 0
    %580 = vmatpush2.bf16.msra.mxu0 %v430
    %581 = vmatprep.subr.bf16.mxu0 0
    %582 = vmatpush2.bf16.msra.mxu0 %v429
    %583 = vmatprep.subr.bf16.mxu0 0
    %584 = vmatpush2.bf16.msra.mxu0 %v428
    %585 = vmatprep.subr.bf16.mxu0 0
    %586 = vmatpush2.bf16.msra.mxu0 %v427
    %587 = vmatprep.mubr.bf16.mxu0 %v168
    %588 = vmatmul.mubr.bf16.gmra.mxu0 %v167
    %v589 = vpop.f32.mrf.mxu0
    %v590 = vadd.f32 %v550, %v589
    %v591 = vpop.f32.mrf.mxu0
    %v592 = vpop.f32.mrf.mxu0
    %v593 = vpop.f32.mrf.mxu0
    %594 = vdwg.mxu0
    %595 = vmatprep.subr.bf16.mxu0 0
    %596 = vmatpush1.bf16.msra.mxu0 %v442
    %597 = vmatprep.subr.bf16.mxu0 0
    %598 = vmatpush1.bf16.msra.mxu0 %v441
    %599 = vmatprep.subr.bf16.mxu0 0
    %600 = vmatpush1.bf16.msra.mxu0 %v440
    %601 = vmatprep.subr.bf16.mxu0 0
    %602 = vmatpush1.bf16.msra.mxu0 %v439
    %603 = vmatprep.subr.bf16.mxu0 0
    %604 = vmatpush1.bf16.msra.mxu0 %v438
    %605 = vmatprep.subr.bf16.mxu0 0
    %606 = vmatpush1.bf16.msra.mxu0 %v437
    %607 = vmatprep.subr.bf16.mxu0 0
    %608 = vmatpush1.bf16.msra.mxu0 %v436
    %609 = vmatprep.subr.bf16.mxu0 0
    %610 = vmatpush1.bf16.msra.mxu0 %v435
    %611 = vmatprep.subr.bf16.mxu0 0
    %612 = vmatpush2.bf16.msra.mxu0 %v450
    %613 = vmatprep.subr.bf16.mxu0 0
    %614 = vmatpush2.bf16.msra.mxu0 %v449
    %615 = vmatprep.subr.bf16.mxu0 0
    %616 = vmatpush2.bf16.msra.mxu0 %v448
    %617 = vmatprep.subr.bf16.mxu0 0
    %618 = vmatpush2.bf16.msra.mxu0 %v447
    %619 = vmatprep.subr.bf16.mxu0 0
    %620 = vmatpush2.bf16.msra.mxu0 %v446
    %621 = vmatprep.subr.bf16.mxu0 0
    %622 = vmatpush2.bf16.msra.mxu0 %v445
    %623 = vmatprep.subr.bf16.mxu0 0
    %624 = vmatpush2.bf16.msra.mxu0 %v444
    %625 = vmatprep.subr.bf16.mxu0 0
    %626 = vmatpush2.bf16.msra.mxu0 %v443
    %627 = vmatprep.mubr.bf16.mxu0 %v170
    %628 = vmatmul.mubr.bf16.gmra.mxu0 %v169
    %v629 = vpop.f32.mrf.mxu0
    %v630 = vadd.f32 %v590, %v629
    %v631 = vpop.f32.mrf.mxu0
    %v632 = vpop.f32.mrf.mxu0
    %v633 = vpop.f32.mrf.mxu0
    %634 = vdwg.mxu0
    %635 = vmatprep.subr.bf16.mxu0 0
    %636 = vmatpush1.bf16.msra.mxu0 %v458
    %637 = vmatprep.subr.bf16.mxu0 0
    %638 = vmatpush1.bf16.msra.mxu0 %v457
    %639 = vmatprep.subr.bf16.mxu0 0
    %640 = vmatpush1.bf16.msra.mxu0 %v456
    %641 = vmatprep.subr.bf16.mxu0 0
    %642 = vmatpush1.bf16.msra.mxu0 %v455
    %643 = vmatprep.subr.bf16.mxu0 0
    %644 = vmatpush1.bf16.msra.mxu0 %v454
    %645 = vmatprep.subr.bf16.mxu0 0
    %646 = vmatpush1.bf16.msra.mxu0 %v453
    %647 = vmatprep.subr.bf16.mxu0 0
    %648 = vmatpush1.bf16.msra.mxu0 %v452
    %649 = vmatprep.subr.bf16.mxu0 0
    %650 = vmatpush1.bf16.msra.mxu0 %v451
    %651 = vmatprep.subr.bf16.mxu0 0
    %652 = vmatpush2.bf16.msra.mxu0 0
    %653 = vmatprep.subr.bf16.mxu0 0
    %654 = vmatpush2.bf16.msra.mxu0 0
    %655 = vmatprep.subr.bf16.mxu0 0
    %656 = vmatpush2.bf16.msra.mxu0 0
    %657 = vmatprep.subr.bf16.mxu0 0
    %658 = vmatpush2.bf16.msra.mxu0 0
    %659 = vmatprep.subr.bf16.mxu0 0
    %660 = vmatpush2.bf16.msra.mxu0 0
    %661 = vmatprep.subr.bf16.mxu0 0
    %662 = vmatpush2.bf16.msra.mxu0 0
    %663 = vmatprep.subr.bf16.mxu0 0
    %664 = vmatpush2.bf16.msra.mxu0 0
    %665 = vmatprep.subr.bf16.mxu0 0
    %666 = vmatpush2.bf16.msra.mxu0 0
    %667 = vmatprep.mubr.bf16.mxu0 0
    %668 = vmatmul.mubr.bf16.gmra.mxu0 %v171
    %v669 = vpop.f32.mrf.mxu0
    %v670 = vadd.f32 %v630, %v669
    %v671 = vpop.f32.mrf.mxu0
    %v672 = vpop.f32.mrf.mxu0
    %v673 = vpop.f32.mrf.mxu0
    %674 = vdwg.mxu0
    %v675 = vmax.f32 %v670, 0.0
    %v676 = vpack.c.bf16 %v675, %v675
    %v677 = vld [vmem:[%s3] sm:$0xff]
    %v678 = vld [vmem:[%s3 + $0x8] sm:$0xff]
    %v679 = vld [vmem:[%s3 + $0x10] sm:$0xff]
    %v680 = vld [vmem:[%s3 + $0x18] sm:$0xff]
    %v681 = vld [vmem:[%s3 + $0x20] sm:$0xff]
    %v682 = vld [vmem:[%s3 + $0x28] sm:$0xff]
    %v683 = vld [vmem:[%s3 + $0x30] sm:$0xff]
    %v684 = vld [vmem:[%s3 + $0x38] sm:$0xff]
    %v685 = vld [vmem:[%s3 + $0x40] sm:$0xff]
    %v686 = vld [vmem:[%s3 + $0x48] sm:$0xff]
    %v687 = vld [vmem:[%s3 + $0x50] sm:$0xff]
    %v688 = vld [vmem:[%s3 + $0x58] sm:$0xff]
    %v689 = vld [vmem:[%s3 + $0x60] sm:$0xff]
    %v690 = vld [vmem:[%s3 + $0x68] sm:$0xff]
    %v691 = vld [vmem:[%s3 + $0x70] sm:$0xff]
    %v692 = vld [vmem:[%s3 + $0x78] sm:$0xff]
    %v693 = vld [vmem:[%s4] sm:$0x3]
    %v695 = vlaneseq
    %v696 = vshrl.u32 %v695, 7
    %v697 = vsub.s32 0, %v696
    %v698 = vrot.slane %v693, %v697
    %v699 = vlaneseq
    %v700 = vshrl.u32 %v699, 7
    %v701 = vsub.s32 1, %v700
    %v702 = vrot.slane %v693, %v701
    %v721 = vunpack.c.l.b16 %v677
    %v722 = vunpack.c.h.b16 %v677
    %v723 = vunpack.c.l.b16 %v678
    %v724 = vunpack.c.h.b16 %v678
    %v725 = vunpack.c.l.b16 %v679
    %v726 = vunpack.c.h.b16 %v679
    %v727 = vunpack.c.l.b16 %v680
    %v728 = vunpack.c.h.b16 %v680
    %v729 = vunpack.c.l.b16 %v681
    %v730 = vunpack.c.h.b16 %v681
    %v731 = vunpack.c.l.b16 %v682
    %v732 = vunpack.c.h.b16 %v682
    %v733 = vunpack.c.l.b16 %v683
    %v734 = vunpack.c.h.b16 %v683
    %v735 = vunpack.c.l.b16 %v684
    %v736 = vunpack.c.h.b16 %v684
    %v737 = vunpack.c.l.b16 %v685
    %v738 = vunpack.c.h.b16 %v685
    %v739 = vunpack.c.l.b16 %v686
    %v740 = vunpack.c.h.b16 %v686
    %v741 = vunpack.c.l.b16 %v687
    %v742 = vunpack.c.h.b16 %v687
    %v743 = vunpack.c.l.b16 %v688
    %v744 = vunpack.c.h.b16 %v688
    %v745 = vunpack.c.l.b16 %v689
    %v746 = vunpack.c.h.b16 %v689
    %v747 = vunpack.c.l.b16 %v690
    %v748 = vunpack.c.h.b16 %v690
    %v749 = vunpack.c.l.b16 %v691
    %v750 = vunpack.c.h.b16 %v691
    %v751 = vunpack.c.l.b16 %v692
    %v752 = vunpack.c.h.b16 %v692
    %v753 = vpack.c.b16 %v723, %v721
    %v754 = vpack.c.b16 %v724, %v722
    %v755 = vpack.c.b16 %v727, %v725
    %v756 = vpack.c.b16 %v728, %v726
    %v757 = vpack.c.b16 %v731, %v729
    %v758 = vpack.c.b16 %v732, %v730
    %v759 = vpack.c.b16 %v735, %v733
    %v760 = vpack.c.b16 %v736, %v734
    %v761 = vpack.c.b16 %v739, %v737
    %v762 = vpack.c.b16 %v740, %v738
    %v763 = vpack.c.b16 %v743, %v741
    %v764 = vpack.c.b16 %v744, %v742
    %v765 = vpack.c.b16 %v747, %v745
    %v766 = vpack.c.b16 %v748, %v746
    %v767 = vpack.c.b16 %v751, %v749
    %v768 = vpack.c.b16 %v752, %v750
    %785 = vmatprep.subr.bf16.mxu0 %v768
    %786 = vmatpush1.bf16.msra.mxu0 %v767
    %787 = vmatprep.subr.bf16.mxu0 %v766
    %788 = vmatpush1.bf16.msra.mxu0 %v765
    %789 = vmatprep.subr.bf16.mxu0 %v764
    %790 = vmatpush1.bf16.msra.mxu0 %v763
    %791 = vmatprep.subr.bf16.mxu0 %v762
    %792 = vmatpush1.bf16.msra.mxu0 %v761
    %793 = vmatprep.subr.bf16.mxu0 %v760
    %794 = vmatpush1.bf16.msra.mxu0 %v759
    %795 = vmatprep.subr.bf16.mxu0 %v758
    %796 = vmatpush1.bf16.msra.mxu0 %v757
    %797 = vmatprep.subr.bf16.mxu0 %v756
    %798 = vmatpush1.bf16.msra.mxu0 %v755
    %799 = vmatprep.subr.bf16.mxu0 %v754
    %800 = vmatpush1.bf16.msra.mxu0 %v753
    %801 = vmatprep.subr.bf16.mxu0 0
    %802 = vmatpush2.bf16.msra.mxu0 0
    %803 = vmatprep.subr.bf16.mxu0 0
    %804 = vmatpush2.bf16.msra.mxu0 0
    %805 = vmatprep.subr.bf16.mxu0 0
    %806 = vmatpush2.bf16.msra.mxu0 0
    %807 = vmatprep.subr.bf16.mxu0 0
    %808 = vmatpush2.bf16.msra.mxu0 0
    %809 = vmatprep.subr.bf16.mxu0 0
    %810 = vmatpush2.bf16.msra.mxu0 0
    %811 = vmatprep.subr.bf16.mxu0 0
    %812 = vmatpush2.bf16.msra.mxu0 0
    %813 = vmatprep.subr.bf16.mxu0 0
    %814 = vmatpush2.bf16.msra.mxu0 0
    %815 = vmatprep.subr.bf16.mxu0 0
    %816 = vmatpush2.bf16.msra.mxu0 0
    %817 = vmatprep.mubr.bf16.mxu0 0
    %818 = vmatmul.mubr.bf16.gmra.mxu0 %v676
    %v819 = vpop.f32.mrf.mxu0
    %v820 = vadd.f32 %v698, %v819
    %v821 = vpop.f32.mrf.mxu0
    %v822 = vadd.f32 %v702, %v821
    %v823 = vpop.f32.mrf.mxu0
    %v824 = vpop.f32.mrf.mxu0
    %825 = vdwg.mxu0
    %v826 = vmax.f32 %v820, 0.0
    %v827 = vmax.f32 %v822, 0.0
    %v828 = vpack.c.bf16 %v826, %v826
    %v829 = vpack.c.bf16 %v827, %v827
    %v830 = vld [vmem:[%s5] sm:$0xf]
    %v831 = vld [vmem:[%s5 + $0x4] sm:$0xf]
    %v832 = vld [vmem:[%s5 + $0x8] sm:$0xf]
    %v833 = vld [vmem:[%s5 + $0xc] sm:$0xf]
    %v834 = vld [vmem:[%s5 + $0x10] sm:$0xf]
    %v835 = vld [vmem:[%s5 + $0x14] sm:$0xf]
    %v836 = vld [vmem:[%s5 + $0x18] sm:$0xf]
    %v837 = vld [vmem:[%s5 + $0x1c] sm:$0xf]
    %v838 = vld [vmem:[%s5 + $0x20] sm:$0xf]
    %v839 = vld [vmem:[%s5 + $0x24] sm:$0xf]
    %v840 = vld [vmem:[%s5 + $0x28] sm:$0xf]
    %v841 = vld [vmem:[%s5 + $0x2c] sm:$0xf]
    %v842 = vld [vmem:[%s5 + $0x30] sm:$0xf]
    %v843 = vld [vmem:[%s5 + $0x34] sm:$0xf]
    %v844 = vld [vmem:[%s5 + $0x38] sm:$0xf]
    %v845 = vld [vmem:[%s5 + $0x3c] sm:$0xf]
    %v846 = vld [vmem:[%s5 + $0x40] sm:$0xf]
    %v847 = vld [vmem:[%s5 + $0x44] sm:$0xf]
    %v848 = vld [vmem:[%s5 + $0x48] sm:$0xf]
    %v849 = vld [vmem:[%s5 + $0x4c] sm:$0xf]
    %v850 = vld [vmem:[%s5 + $0x50] sm:$0xf]
    %v851 = vld [vmem:[%s5 + $0x54] sm:$0xf]
    %v852 = vld [vmem:[%s5 + $0x58] sm:$0xf]
    %v853 = vld [vmem:[%s5 + $0x5c] sm:$0xf]
    %v854 = vld [vmem:[%s5 + $0x60] sm:$0xf]
    %v855 = vld [vmem:[%s5 + $0x64] sm:$0xf]
    %v856 = vld [vmem:[%s5 + $0x68] sm:$0xf]
    %v857 = vld [vmem:[%s5 + $0x6c] sm:$0xf]
    %v858 = vld [vmem:[%s5 + $0x70] sm:$0xf]
    %v859 = vld [vmem:[%s5 + $0x74] sm:$0xf]
    %v860 = vld [vmem:[%s5 + $0x78] sm:$0xf]
    %v861 = vld [vmem:[%s5 + $0x7c] sm:$0xf]
    %v862 = vld [vmem:[%s6] sm:$0x1]
    %v864 = vlaneseq
    %v865 = vshrl.u32 %v864, 7
    %v866 = vsub.s32 0, %v865
    %v867 = vrot.slane %v862, %v866
    %v901 = vunpack.c.l.b16 %v830
    %v902 = vunpack.c.l.b16 %v831
    %v903 = vunpack.c.l.b16 %v832
    %v904 = vunpack.c.l.b16 %v833
    %v905 = vunpack.c.l.b16 %v834
    %v906 = vunpack.c.l.b16 %v835
    %v907 = vunpack.c.l.b16 %v836
    %v908 = vunpack.c.l.b16 %v837
    %v909 = vunpack.c.l.b16 %v838
    %v910 = vunpack.c.l.b16 %v839
    %v911 = vunpack.c.l.b16 %v840
    %v912 = vunpack.c.l.b16 %v841
    %v913 = vunpack.c.l.b16 %v842
    %v914 = vunpack.c.l.b16 %v843
    %v915 = vunpack.c.l.b16 %v844
    %v916 = vunpack.c.l.b16 %v845
    %v917 = vunpack.c.l.b16 %v846
    %v918 = vunpack.c.l.b16 %v847
    %v919 = vunpack.c.l.b16 %v848
    %v920 = vunpack.c.l.b16 %v849
    %v921 = vunpack.c.l.b16 %v850
    %v922 = vunpack.c.l.b16 %v851
    %v923 = vunpack.c.l.b16 %v852
    %v924 = vunpack.c.l.b16 %v853
    %v925 = vunpack.c.l.b16 %v854
    %v926 = vunpack.c.l.b16 %v855
    %v927 = vunpack.c.l.b16 %v856
    %v928 = vunpack.c.l.b16 %v857
    %v929 = vunpack.c.l.b16 %v858
    %v930 = vunpack.c.l.b16 %v859
    %v931 = vunpack.c.l.b16 %v860
    %v932 = vunpack.c.l.b16 %v861
    %v933 = vpack.c.b16 %v902, %v901
    %v934 = vpack.c.b16 %v904, %v903
    %v935 = vpack.c.b16 %v906, %v905
    %v936 = vpack.c.b16 %v908, %v907
    %v937 = vpack.c.b16 %v910, %v909
    %v938 = vpack.c.b16 %v912, %v911
    %v939 = vpack.c.b16 %v914, %v913
    %v940 = vpack.c.b16 %v916, %v915
    %v941 = vpack.c.b16 %v918, %v917
    %v942 = vpack.c.b16 %v920, %v919
    %v943 = vpack.c.b16 %v922, %v921
    %v944 = vpack.c.b16 %v924, %v923
    %v945 = vpack.c.b16 %v926, %v925
    %v946 = vpack.c.b16 %v928, %v927
    %v947 = vpack.c.b16 %v930, %v929
    %v948 = vpack.c.b16 %v932, %v931
    %965 = vmatprep.subr.bf16.mxu0 0
    %966 = vmatpush1.bf16.msra.mxu0 %v940
    %967 = vmatprep.subr.bf16.mxu0 0
    %968 = vmatpush1.bf16.msra.mxu0 %v939
    %969 = vmatprep.subr.bf16.mxu0 0
    %970 = vmatpush1.bf16.msra.mxu0 %v938
    %971 = vmatprep.subr.bf16.mxu0 0
    %972 = vmatpush1.bf16.msra.mxu0 %v937
    %973 = vmatprep.subr.bf16.mxu0 0
    %974 = vmatpush1.bf16.msra.mxu0 %v936
    %975 = vmatprep.subr.bf16.mxu0 0
    %976 = vmatpush1.bf16.msra.mxu0 %v935
    %977 = vmatprep.subr.bf16.mxu0 0
    %978 = vmatpush1.bf16.msra.mxu0 %v934
    %979 = vmatprep.subr.bf16.mxu0 0
    %980 = vmatpush1.bf16.msra.mxu0 %v933
    %981 = vmatprep.subr.bf16.mxu0 0
    %982 = vmatpush2.bf16.msra.mxu0 %v948
    %983 = vmatprep.subr.bf16.mxu0 0
    %984 = vmatpush2.bf16.msra.mxu0 %v947
    %985 = vmatprep.subr.bf16.mxu0 0
    %986 = vmatpush2.bf16.msra.mxu0 %v946
    %987 = vmatprep.subr.bf16.mxu0 0
    %988 = vmatpush2.bf16.msra.mxu0 %v945
    %989 = vmatprep.subr.bf16.mxu0 0
    %990 = vmatpush2.bf16.msra.mxu0 %v944
    %991 = vmatprep.subr.bf16.mxu0 0
    %992 = vmatpush2.bf16.msra.mxu0 %v943
    %993 = vmatprep.subr.bf16.mxu0 0
    %994 = vmatpush2.bf16.msra.mxu0 %v942
    %995 = vmatprep.subr.bf16.mxu0 0
    %996 = vmatpush2.bf16.msra.mxu0 %v941
    %997 = vmatprep.mubr.bf16.mxu0 %v829
    %998 = vmatmul.mubr.bf16.gmra.mxu0 %v828
    %v999 = vpop.f32.mrf.mxu0
    %v1000 = vadd.f32 %v867, %v999
    %v1001 = vpop.f32.mrf.mxu0
    %v1002 = vpop.f32.mrf.mxu0
    %v1003 = vpop.f32.mrf.mxu0
    %1004 = vdwg.mxu0
    %1005 = vmax.xlane.f32.xlu0 %v1000
    %v1006 = vpop.xlane.xlu0 %1005
    %v1007 = vsub.f32 %v1000, %v1006
    %v1008 = vmul.f32 %v1007, 1.442695
    %v1009 = vpow.pop %v1008
    %1010 = vadd.xlane.f32.xlu0 %v1009
    %v1011 = vpop.xlane.xlu0 %1010
    %v1012 = vlog2.pop %v1011
    %v1013 = vmul.f32 %v1012, 0.6931472
    %v1014 = vsub.f32 %v1007, %v1013
    %1015 = vst [vmem:[#allocation2] sm:$0xff] %v1000
    %1016 = vst [vmem:[#allocation4] sm:$0xff] %v1014
    // Predicated region
    $region30: #{ff_nn_forward.1} parent=1 // pred_check
      _
    $region31: #{ff_nn_forward.1} parent=1 // pred_check_branch
      %1018 = sbr.rel (0) target = $region33
    $region32: #{ff_nn_forward.1} parent=1 // pred_region
      %s1020 = ssub.s32 128, 128
      %1021 = vsyncadd [#allocation3], %s1020
      %s1023 = sshll.u32 [#allocation2], 4
      %s1024 = int_to_ptr.vmem [resolvable:$true] %s1023
      %1026 = dma.vmem_to_hbm [thread:$0]  %s1024, 128, %s7, [#allocation3]
    $region33: #{ff_nn_forward.1} parent=1 // pred_fallthru
      _
    // Predicated region
    $region34: #{ff_nn_forward.1} parent=1 // pred_check
      _
    $region35: #{ff_nn_forward.1} parent=1 // pred_check_branch
      %1028 = sbr.rel (0) target = $region37
    $region36: #{ff_nn_forward.1} parent=1 // pred_region
      %s1030 = ssub.s32 128, 128
      %1031 = vsyncadd [#allocation5], %s1030
      %s1033 = sshll.u32 [#allocation4], 4
      %s1034 = int_to_ptr.vmem [resolvable:$true] %s1033
      %1036 = dma.vmem_to_hbm [thread:$0]  %s1034, 128, %s8, [#allocation5]
    $region37: #{ff_nn_forward.1} parent=1 // pred_fallthru
      _
    // Predicated region
    $region38: #{ff_nn_forward.1} parent=1 // pred_check
      _
    $region39: #{ff_nn_forward.1} parent=1 // pred_check_branch
      %1038 = sbr.rel (0) target = $region41
    $region40: #{ff_nn_forward.1} parent=1 // pred_region
      %1039 = dma.done [#allocation3], 128
    $region41: #{ff_nn_forward.1} parent=1 // pred_fallthru
      _
    // Predicated region
    $region42: #{ff_nn_forward.1} parent=1 // pred_check
      _
    $region43: #{ff_nn_forward.1} parent=1 // pred_check_branch
      %1041 = sbr.rel (0) target = $region45
    $region44: #{ff_nn_forward.1} parent=1 // pred_region
      %1042 = dma.done [#allocation5], 128
    $region45: #{ff_nn_forward.1} parent=1 // pred_fallthru
      _
    %1043 = vsyncpa [#allocation3], 1
    %1044 = vsyncpa [#allocation5], 1

</llo_original>
